<compile_context>
chip_gen: v5e
topology: v5e:2x2
jax: 0.10.0
libtpu: 0.0.40
codegen_flags: <defaults>
</compile_context>

<pallas_src>
import functools

import jax
import jax.numpy as jnp
from jax.experimental import pallas as pl
from jax.experimental.pallas import tpu as pltpu


def _decoder_kernel(x_ref, w0_ref, b0_ref, w1_ref, b1_ref, out_ref, *, pack):
    """One batch tile.

    x_ref:  (tm, pack*E)   -- `pack` consecutive batch rows folded into lanes
    w0_ref: (E, H)          b0_ref: (1, H)
    w1_ref: (H, O)          b1_ref: (1, pack*O)   (bias tiled `pack` times)
    out_ref:(tm, pack*O)   -- lane-dense packed output
    """
    w0 = w0_ref[...]
    w1 = w1_ref[...]
    b0 = b0_ref[...].astype(jnp.float32)
    b1 = b1_ref[...].astype(jnp.float32)

    # One dense (lane-full) load of the packed x tile, then split into the
    # `pack` row-groups along the lane dimension (same mechanism as the
    # rotary-embedding half-split, known to lower cleanly).
    x_all = x_ref[...]
    xs = jnp.split(x_all, pack, axis=-1) if pack > 1 else [x_all]

    pieces = []
    for xk in xs:  # static unroll over the pack factor
        h = jnp.dot(xk, w0, preferred_element_type=jnp.float32)   # (tm, H) f32
        h = jnp.maximum(h + b0, 0.0)
        h = h.astype(w1.dtype)          # bf16 MXU inputs when weights are bf16
        pieces.append(jnp.dot(h, w1, preferred_element_type=jnp.float32))

    # Reassemble into a lane-dense (tm, pack*O) value -> full-width stores.
    y = pieces[0] if pack == 1 else jnp.concatenate(pieces, axis=-1)
    out_ref[...] = (y + b1).astype(out_ref.dtype)


def _pick_block_rows_packed(batch_packed):
    """Packed rows per grid step.

    Big tiles (up to 1024 packed == 8192 original rows) amortize the ~0.35us
    per-grid-step overhead; but keep >= 4 steps when the batch allows so that
    v7x can shard the "parallel" batch axis across its 2 TensorCores.
    """
    if batch_packed <= 8:
        return batch_packed                     # single full block (always legal)
    cap = 1024                                  # 8192 original rows per step
    quarter = -(-batch_packed // 4)             # cdiv(batch_packed, 4)
    tm = min(cap, max(8, quarter))
    return ((tm + 7) // 8) * 8                  # sublane-aligned


def decoder_forward(x, w0, b0, w1, b1, *, block_rows=None, pack=8):
    """Forward of Decoder: Linear(E->H) -> ReLU -> Linear(H->O).

    x: (B, E); w0: (E, H); b0: (H,); w1: (H, O); b1: (O,)
    (weights stored pre-transposed as (in_features, out_features)).
    `pack` consecutive batch rows are folded into lanes so that both the x load
    and the output store are lane-dense (pack * O == 128 for O == 16).
    `block_rows` (optional) = original batch rows per grid step.
    """
    B, E = x.shape
    H = w0.shape[1]
    O = w1.shape[1]
    if pack < 1:
        raise ValueError("pack must be >= 1")

    # Pad the batch to a multiple of `pack` (rows are independent; padded rows
    # are sliced off below), then fold `pack` rows into lanes. Both reshapes
    # here and on the output are contiguous -> free bitcasts in XLA.
    Bp = -(-B // pack) * pack
    xx = jnp.pad(x, ((0, Bp - B), (0, 0))) if Bp != B else x
    bpk = Bp // pack
    xp = xx.reshape(bpk, pack * E)

    b0_2d = b0.reshape(1, H)
    b1_2d = jnp.tile(b1.reshape(1, O), (1, pack))       # (1, pack*O)

    if block_rows is None:
        tm = _pick_block_rows_packed(bpk)
    else:
        tm = max(1, block_rows // pack)
    grid = (pl.cdiv(bpk, tm),)

    # Advisory cost for XLA's scheduler; per-operand itemsizes (mixed dtypes ok).
    def _nbytes(a):
        return a.size * jnp.dtype(a.dtype).itemsize

    cost = pl.CostEstimate(
        flops=2 * Bp * (E * H + H * O),
        transcendentals=0,
        bytes_accessed=(_nbytes(xp) + _nbytes(w0) + _nbytes(b0_2d)
                        + _nbytes(w1) + _nbytes(b1_2d)
                        + Bp * O * jnp.dtype(x.dtype).itemsize),
    )

    kernel = functools.partial(_decoder_kernel, pack=pack)

    out_packed = pl.pallas_call(
        kernel,
        out_shape=jax.ShapeDtypeStruct((bpk, pack * O), x.dtype),
        grid_spec=pltpu.PrefetchScalarGridSpec(
            num_scalar_prefetch=0,
            grid=grid,
            in_specs=[
                # Activations: tiled along (packed) batch, double-buffered.
                pl.BlockSpec((tm, pack * E), lambda i: (i, 0)),
                # Weights / biases: constant index maps -> resident in VMEM.
                pl.BlockSpec((E, H), lambda i: (0, 0)),
                pl.BlockSpec((1, H), lambda i: (0, 0)),
                pl.BlockSpec((H, O), lambda i: (0, 0)),
                pl.BlockSpec((1, pack * O), lambda i: (0, 0)),
            ],
            out_specs=pl.BlockSpec((tm, pack * O), lambda i: (i, 0)),
        ),
        compiler_params=pltpu.CompilerParams(
            # Batch tiles are independent -> v7x shards them across both TCs.
            dimension_semantics=("parallel",),
            # Explicit cap: plenty for the largest tile (~6 MB used), and safely
            # below v7x's 64 MiB physical VMEM.
            vmem_limit_bytes=48 * 1024 * 1024,
        ),
        cost_estimate=cost,
    )(xp, w0, b0_2d, w1, b1_2d)

    out = out_packed.reshape(Bp, O)     # contiguous -> free
    return out[:B] if Bp != B else out


def init_params(key, emb_size, out_size, hidden_size=128):
    """Deterministic init mirroring nn.Linear shapes (stored transposed)."""
    k0, k1, k2, k3 = jax.random.split(key, 4)
    lim0 = 1.0 / jnp.sqrt(emb_size)
    w0 = jax.random.uniform(k0, (emb_size, hidden_size), jnp.float32, -lim0, lim0)
    b0 = jax.random.uniform(k1, (hidden_size,), jnp.float32, -lim0, lim0)
    lim1 = 1.0 / jnp.sqrt(hidden_size)
    w1 = jax.random.uniform(k2, (hidden_size, out_size), jnp.float32, -lim1, lim1)
    b1 = jax.random.uniform(k3, (out_size,), jnp.float32, -lim1, lim1)
    return w0, b0, w1, b1


if __name__ == "__main__":
    emb_size, hidden_size, out_size = 32, 128, 16

    key = jax.random.PRNGKey(0)
    kx, kp = jax.random.split(key)
    w0, b0, w1, b1 = init_params(kp, emb_size, out_size, hidden_size)

    def ref_fwd(xv, w0v, b0v, w1v, b1v):
        h = jnp.maximum(
            xv.astype(jnp.float32) @ w0v.astype(jnp.float32)
            + b0v.astype(jnp.float32), 0.0)
        return h @ w1v.astype(jnp.float32) + b1v.astype(jnp.float32)

    # 1) f32, batch divisible by the pack factor, single grid step.
    x = jax.random.normal(kx, (24, emb_size), jnp.float32)
    out = jax.block_until_ready(decoder_forward(x, w0, b0, w1, b1))
    assert out.shape == (24, out_size)
    assert jnp.allclose(out, ref_fwd(x, w0, b0, w1, b1), atol=1e-5, rtol=1e-5)

    # 2) Multi-step grid + batch not divisible by 8 (exercises padding + the
    #    pipelined/partial-tile path).
    x2 = jax.random.normal(jax.random.PRNGKey(1), (130, emb_size), jnp.float32)
    out2 = jax.block_until_ready(
        decoder_forward(x2, w0, b0, w1, b1, block_rows=64))
    assert out2.shape == (130, out_size)
    assert jnp.allclose(out2, ref_fwd(x2, w0, b0, w1, b1), atol=1e-5, rtol=1e-5)

    # 3) bf16 on the wire (halves HBM traffic); f32 MXU accumulation inside.
    xb = x.astype(jnp.bfloat16)
    w0b, b0b, w1b, b1b = (t.astype(jnp.bfloat16) for t in (w0, b0, w1, b1))
    outb = jax.block_until_ready(decoder_forward(xb, w0b, b0b, w1b, b1b))
    refb = ref_fwd(xb, w0b, b0b, w1b, b1b)
    assert outb.dtype == jnp.bfloat16
    assert jnp.allclose(outb.astype(jnp.float32), refb, atol=5e-2, rtol=5e-2)

    print("KERNEL_OK")
</pallas_src>

<mosaic_0001>
module attributes {stable_mosaic.version = 11 : i64} {
  func.func @_decoder_kernel(%arg0: i32, %arg1: memref<3x256xf32, #tpu.memory_space<vmem>>, %arg2: memref<32x128xf32, #tpu.memory_space<vmem>>, %arg3: memref<1x128xf32, #tpu.memory_space<vmem>>, %arg4: memref<128x16xf32, #tpu.memory_space<vmem>>, %arg5: memref<1x128xf32, #tpu.memory_space<vmem>>, %arg6: memref<3x128xf32, #tpu.memory_space<vmem>>) attributes {dimension_semantics = [#tpu.dimension_semantics<parallel>], iteration_bounds = array<i64: 1>, scalar_prefetch = 0 : i64, scratch_operands = 0 : i64, tpu.core_type = #tpu.core_type<tc>, window_params = [{transform_indices = @transform_0, window_bounds = array<i64: 3, 256>}, {pipeline_mode = #tpu.pipeline_mode<synchronous>, transform_indices = @transform_1, window_bounds = array<i64: 32, 128>}, {pipeline_mode = #tpu.pipeline_mode<synchronous>, transform_indices = @transform_2, window_bounds = array<i64: 1, 128>}, {pipeline_mode = #tpu.pipeline_mode<synchronous>, transform_indices = @transform_3, window_bounds = array<i64: 128, 16>}, {pipeline_mode = #tpu.pipeline_mode<synchronous>, transform_indices = @transform_4, window_bounds = array<i64: 1, 128>}, {transform_indices = @transform_5, window_bounds = array<i64: 3, 128>}]} {
    %c0 = arith.constant 0 : index
    %c0_0 = arith.constant 0 : index
    %0 = vector.load %arg2[%c0, %c0_0] : memref<32x128xf32, #tpu.memory_space<vmem>>, vector<32x128xf32>
    %c0_1 = arith.constant 0 : index
    %c0_2 = arith.constant 0 : index
    %1 = vector.load %arg4[%c0_1, %c0_2] : memref<128x16xf32, #tpu.memory_space<vmem>>, vector<128x16xf32>
    %c0_3 = arith.constant 0 : index
    %c0_4 = arith.constant 0 : index
    %2 = vector.load %arg3[%c0_3, %c0_4] : memref<1x128xf32, #tpu.memory_space<vmem>>, vector<1x128xf32>
    %c0_5 = arith.constant 0 : index
    %c0_6 = arith.constant 0 : index
    %3 = vector.load %arg5[%c0_5, %c0_6] : memref<1x128xf32, #tpu.memory_space<vmem>>, vector<1x128xf32>
    %c0_7 = arith.constant 0 : index
    %c0_8 = arith.constant 0 : index
    %4 = vector.load %arg1[%c0_7, %c0_8] : memref<3x256xf32, #tpu.memory_space<vmem>>, vector<3x256xf32>
    %5 = vector.extract_strided_slice %4 {offsets = [0, 0], sizes = [3, 32], strides = [1, 1]} : vector<3x256xf32> to vector<3x32xf32>
    %6 = vector.extract_strided_slice %4 {offsets = [0, 32], sizes = [3, 32], strides = [1, 1]} : vector<3x256xf32> to vector<3x32xf32>
    %7 = vector.extract_strided_slice %4 {offsets = [0, 64], sizes = [3, 32], strides = [1, 1]} : vector<3x256xf32> to vector<3x32xf32>
    %8 = vector.extract_strided_slice %4 {offsets = [0, 96], sizes = [3, 32], strides = [1, 1]} : vector<3x256xf32> to vector<3x32xf32>
    %9 = vector.extract_strided_slice %4 {offsets = [0, 128], sizes = [3, 32], strides = [1, 1]} : vector<3x256xf32> to vector<3x32xf32>
    %10 = vector.extract_strided_slice %4 {offsets = [0, 160], sizes = [3, 32], strides = [1, 1]} : vector<3x256xf32> to vector<3x32xf32>
    %11 = vector.extract_strided_slice %4 {offsets = [0, 192], sizes = [3, 32], strides = [1, 1]} : vector<3x256xf32> to vector<3x32xf32>
    %12 = vector.extract_strided_slice %4 {offsets = [0, 224], sizes = [3, 32], strides = [1, 1]} : vector<3x256xf32> to vector<3x32xf32>
    %cst = arith.constant dense<0.000000e+00> : vector<3x128xf32>
    %13 = tpu.matmul %5, %0, %cst {dimension_numbers = #tpu.dot_dimension_numbers<[1], [0], [0], [1], [0, 0, 1, 1], [], []>} : vector<3x32xf32>, vector<32x128xf32>, vector<3x128xf32> -> vector<3x128xf32>
    %14 = vector.broadcast %2 : vector<1x128xf32> to vector<3x128xf32>
    %15 = arith.addf %13, %14 : vector<3x128xf32>
    %cst_9 = arith.constant 0.000000e+00 : f32
    %16 = vector.broadcast %cst_9 : f32 to vector<3x128xf32>
    %17 = arith.maximumf %15, %16 : vector<3x128xf32>
    %cst_10 = arith.constant dense<0.000000e+00> : vector<3x16xf32>
    %18 = tpu.matmul %17, %1, %cst_10 {dimension_numbers = #tpu.dot_dimension_numbers<[1], [0], [0], [1], [0, 0, 1, 1], [], []>} : vector<3x128xf32>, vector<128x16xf32>, vector<3x16xf32> -> vector<3x16xf32>
    %cst_11 = arith.constant dense<0.000000e+00> : vector<3x128xf32>
    %19 = tpu.matmul %6, %0, %cst_11 {dimension_numbers = #tpu.dot_dimension_numbers<[1], [0], [0], [1], [0, 0, 1, 1], [], []>} : vector<3x32xf32>, vector<32x128xf32>, vector<3x128xf32> -> vector<3x128xf32>
    %20 = vector.broadcast %2 : vector<1x128xf32> to vector<3x128xf32>
    %21 = arith.addf %19, %20 : vector<3x128xf32>
    %cst_12 = arith.constant 0.000000e+00 : f32
    %22 = vector.broadcast %cst_12 : f32 to vector<3x128xf32>
    %23 = arith.maximumf %21, %22 : vector<3x128xf32>
    %cst_13 = arith.constant dense<0.000000e+00> : vector<3x16xf32>
    %24 = tpu.matmul %23, %1, %cst_13 {dimension_numbers = #tpu.dot_dimension_numbers<[1], [0], [0], [1], [0, 0, 1, 1], [], []>} : vector<3x128xf32>, vector<128x16xf32>, vector<3x16xf32> -> vector<3x16xf32>
    %cst_14 = arith.constant dense<0.000000e+00> : vector<3x128xf32>
    %25 = tpu.matmul %7, %0, %cst_14 {dimension_numbers = #tpu.dot_dimension_numbers<[1], [0], [0], [1], [0, 0, 1, 1], [], []>} : vector<3x32xf32>, vector<32x128xf32>, vector<3x128xf32> -> vector<3x128xf32>
    %26 = vector.broadcast %2 : vector<1x128xf32> to vector<3x128xf32>
    %27 = arith.addf %25, %26 : vector<3x128xf32>
    %cst_15 = arith.constant 0.000000e+00 : f32
    %28 = vector.broadcast %cst_15 : f32 to vector<3x128xf32>
    %29 = arith.maximumf %27, %28 : vector<3x128xf32>
    %cst_16 = arith.constant dense<0.000000e+00> : vector<3x16xf32>
    %30 = tpu.matmul %29, %1, %cst_16 {dimension_numbers = #tpu.dot_dimension_numbers<[1], [0], [0], [1], [0, 0, 1, 1], [], []>} : vector<3x128xf32>, vector<128x16xf32>, vector<3x16xf32> -> vector<3x16xf32>
    %cst_17 = arith.constant dense<0.000000e+00> : vector<3x128xf32>
    %31 = tpu.matmul %8, %0, %cst_17 {dimension_numbers = #tpu.dot_dimension_numbers<[1], [0], [0], [1], [0, 0, 1, 1], [], []>} : vector<3x32xf32>, vector<32x128xf32>, vector<3x128xf32> -> vector<3x128xf32>
    %32 = vector.broadcast %2 : vector<1x128xf32> to vector<3x128xf32>
    %33 = arith.addf %31, %32 : vector<3x128xf32>
    %cst_18 = arith.constant 0.000000e+00 : f32
    %34 = vector.broadcast %cst_18 : f32 to vector<3x128xf32>
    %35 = arith.maximumf %33, %34 : vector<3x128xf32>
    %cst_19 = arith.constant dense<0.000000e+00> : vector<3x16xf32>
    %36 = tpu.matmul %35, %1, %cst_19 {dimension_numbers = #tpu.dot_dimension_numbers<[1], [0], [0], [1], [0, 0, 1, 1], [], []>} : vector<3x128xf32>, vector<128x16xf32>, vector<3x16xf32> -> vector<3x16xf32>
    %cst_20 = arith.constant dense<0.000000e+00> : vector<3x128xf32>
    %37 = tpu.matmul %9, %0, %cst_20 {dimension_numbers = #tpu.dot_dimension_numbers<[1], [0], [0], [1], [0, 0, 1, 1], [], []>} : vector<3x32xf32>, vector<32x128xf32>, vector<3x128xf32> -> vector<3x128xf32>
    %38 = vector.broadcast %2 : vector<1x128xf32> to vector<3x128xf32>
    %39 = arith.addf %37, %38 : vector<3x128xf32>
    %cst_21 = arith.constant 0.000000e+00 : f32
    %40 = vector.broadcast %cst_21 : f32 to vector<3x128xf32>
    %41 = arith.maximumf %39, %40 : vector<3x128xf32>
    %cst_22 = arith.constant dense<0.000000e+00> : vector<3x16xf32>
    %42 = tpu.matmul %41, %1, %cst_22 {dimension_numbers = #tpu.dot_dimension_numbers<[1], [0], [0], [1], [0, 0, 1, 1], [], []>} : vector<3x128xf32>, vector<128x16xf32>, vector<3x16xf32> -> vector<3x16xf32>
    %cst_23 = arith.constant dense<0.000000e+00> : vector<3x128xf32>
    %43 = tpu.matmul %10, %0, %cst_23 {dimension_numbers = #tpu.dot_dimension_numbers<[1], [0], [0], [1], [0, 0, 1, 1], [], []>} : vector<3x32xf32>, vector<32x128xf32>, vector<3x128xf32> -> vector<3x128xf32>
    %44 = vector.broadcast %2 : vector<1x128xf32> to vector<3x128xf32>
    %45 = arith.addf %43, %44 : vector<3x128xf32>
    %cst_24 = arith.constant 0.000000e+00 : f32
    %46 = vector.broadcast %cst_24 : f32 to vector<3x128xf32>
    %47 = arith.maximumf %45, %46 : vector<3x128xf32>
    %cst_25 = arith.constant dense<0.000000e+00> : vector<3x16xf32>
    %48 = tpu.matmul %47, %1, %cst_25 {dimension_numbers = #tpu.dot_dimension_numbers<[1], [0], [0], [1], [0, 0, 1, 1], [], []>} : vector<3x128xf32>, vector<128x16xf32>, vector<3x16xf32> -> vector<3x16xf32>
    %cst_26 = arith.constant dense<0.000000e+00> : vector<3x128xf32>
    %49 = tpu.matmul %11, %0, %cst_26 {dimension_numbers = #tpu.dot_dimension_numbers<[1], [0], [0], [1], [0, 0, 1, 1], [], []>} : vector<3x32xf32>, vector<32x128xf32>, vector<3x128xf32> -> vector<3x128xf32>
    %50 = vector.broadcast %2 : vector<1x128xf32> to vector<3x128xf32>
    %51 = arith.addf %49, %50 : vector<3x128xf32>
    %cst_27 = arith.constant 0.000000e+00 : f32
    %52 = vector.broadcast %cst_27 : f32 to vector<3x128xf32>
    %53 = arith.maximumf %51, %52 : vector<3x128xf32>
    %cst_28 = arith.constant dense<0.000000e+00> : vector<3x16xf32>
    %54 = tpu.matmul %53, %1, %cst_28 {dimension_numbers = #tpu.dot_dimension_numbers<[1], [0], [0], [1], [0, 0, 1, 1], [], []>} : vector<3x128xf32>, vector<128x16xf32>, vector<3x16xf32> -> vector<3x16xf32>
    %cst_29 = arith.constant dense<0.000000e+00> : vector<3x128xf32>
    %55 = tpu.matmul %12, %0, %cst_29 {dimension_numbers = #tpu.dot_dimension_numbers<[1], [0], [0], [1], [0, 0, 1, 1], [], []>} : vector<3x32xf32>, vector<32x128xf32>, vector<3x128xf32> -> vector<3x128xf32>
    %56 = vector.broadcast %2 : vector<1x128xf32> to vector<3x128xf32>
    %57 = arith.addf %55, %56 : vector<3x128xf32>
    %cst_30 = arith.constant 0.000000e+00 : f32
    %58 = vector.broadcast %cst_30 : f32 to vector<3x128xf32>
    %59 = arith.maximumf %57, %58 : vector<3x128xf32>
    %cst_31 = arith.constant dense<0.000000e+00> : vector<3x16xf32>
    %60 = tpu.matmul %59, %1, %cst_31 {dimension_numbers = #tpu.dot_dimension_numbers<[1], [0], [0], [1], [0, 0, 1, 1], [], []>} : vector<3x128xf32>, vector<128x16xf32>, vector<3x16xf32> -> vector<3x16xf32>
    %61 = tpu.concatenate %18, %24, %30, %36, %42, %48, %54, %60 in 1 : vector<3x16xf32>, vector<3x16xf32>, vector<3x16xf32>, vector<3x16xf32>, vector<3x16xf32>, vector<3x16xf32>, vector<3x16xf32>, vector<3x16xf32> -> vector<3x128xf32>
    %62 = vector.broadcast %3 : vector<1x128xf32> to vector<3x128xf32>
    %63 = arith.addf %61, %62 : vector<3x128xf32>
    %c0_32 = arith.constant 0 : index
    %c0_33 = arith.constant 0 : index
    %64 = vector.load %arg6[%c0_32, %c0_33] : memref<3x128xf32, #tpu.memory_space<vmem>>, vector<3x128xf32>
    tpu.vector_store %arg6[%c0_32, %c0_33], %63 {strides = array<i32>} : memref<3x128xf32, #tpu.memory_space<vmem>>, vector<3x128xf32>,
    return
  }
  func.func @transform_0(%arg0: i32) -> (i32, i32) {
    %c0_i32 = arith.constant 0 : i32
    %c0_i32_0 = arith.constant 0 : i32
    return %arg0, %c0_i32 : i32, i32
  }
  func.func @transform_1(%arg0: i32) -> (i32, i32) {
    %c0_i32 = arith.constant 0 : i32
    %c0_i32_0 = arith.constant 0 : i32
    %c0_i32_1 = arith.constant 0 : i32
    return %c0_i32, %c0_i32_0 : i32, i32
  }
  func.func @transform_2(%arg0: i32) -> (i32, i32) {
    %c0_i32 = arith.constant 0 : i32
    %c0_i32_0 = arith.constant 0 : i32
    %c0_i32_1 = arith.constant 0 : i32
    return %c0_i32, %c0_i32_0 : i32, i32
  }
  func.func @transform_3(%arg0: i32) -> (i32, i32) {
    %c0_i32 = arith.constant 0 : i32
    %c0_i32_0 = arith.constant 0 : i32
    %c0_i32_1 = arith.constant 0 : i32
    return %c0_i32, %c0_i32_0 : i32, i32
  }
  func.func @transform_4(%arg0: i32) -> (i32, i32) {
    %c0_i32 = arith.constant 0 : i32
    %c0_i32_0 = arith.constant 0 : i32
    %c0_i32_1 = arith.constant 0 : i32
    return %c0_i32, %c0_i32_0 : i32, i32
  }
  func.func @transform_5(%arg0: i32) -> (i32, i32) {
    %c0_i32 = arith.constant 0 : i32
    %c0_i32_0 = arith.constant 0 : i32
    return %arg0, %c0_i32 : i32, i32
  }
}

</mosaic_0001>

<llo_original>
// kernel: tpu_custom_call.1
$region0: #{tpu_custom_call.1}
  #allocation0 [shape = 'u32[]', space=smem, size = 0x4, offset = 0x4, fixed_abs, tag = 'smem constant byte address 0x4 - core index']
  #allocation1 [shape = 'u32[72,128]{1,0:T(1,128)}', space=vmem, size = 0x9000, scoped, tag = 'internal scratch']
  %s0 = inlined_call_operand.vmem [shape: f32[3,256], index: 0, kind: input, shape index: {}]
  %s1 = inlined_call_operand.vmem [shape: f32[32,128], index: 1, kind: input, shape index: {}]
  %s2 = inlined_call_operand.vmem [shape: f32[1,128], index: 2, kind: input, shape index: {}]
  %s3 = inlined_call_operand.vmem [shape: f32[128,16], index: 3, kind: input, shape index: {}]
  %s4 = inlined_call_operand.vmem [shape: f32[1,128], index: 4, kind: input, shape index: {}]
  %s5 = inlined_call_operand.hbm [shape: f32[3,128], index: 5, kind: output, shape index: {}]
  %s6 = sld [smem:[#allocation0]]
  $region30: #{tpu_custom_call.1} parent=0
    _
  %s8 = ssub.s32 1, %s6
  %s9 = scalar_select 0, %s8, %s6
  $region1: #{tpu_custom_call.1} parent=0
    #allocation2 [shape = 'u8[2048]{0}', space=vmem, size = 0x800, scoped, tag = 'output window, operand 0, single buffered']
    #allocation3 [shape = 's32[1]{0}', space=sflag, size = 0x4, scoped, tag = 'scoped memory for tpu_custom_call.1']
    %10 = vsyncpa [#allocation3], 0
    // Predicated region
    $region2: #{tpu_custom_call.1} parent=1 // pred_check
      _
    $region3: #{tpu_custom_call.1} parent=1 // pred_check_branch
      %12 = sbr.rel (0) target = $region5
    $region4: #{tpu_custom_call.1} parent=1 // pred_region
      _
    $region5: #{tpu_custom_call.1} parent=1 // pred_fallthru
      _
    // Predicated region
    $region6: #{tpu_custom_call.1} parent=1 // pred_check
      _
    $region7: #{tpu_custom_call.1} parent=1 // pred_check_branch
      %14 = sbr.rel (0) target = $region9
    $region8: #{tpu_custom_call.1} parent=1 // pred_region
      _
    $region9: #{tpu_custom_call.1} parent=1 // pred_fallthru
      _
    // Predicated region
    $region10: #{tpu_custom_call.1} parent=1 // pred_check
      _
    $region11: #{tpu_custom_call.1} parent=1 // pred_check_branch
      %16 = sbr.rel (0) target = $region13
    $region12: #{tpu_custom_call.1} parent=1 // pred_region
      _
    $region13: #{tpu_custom_call.1} parent=1 // pred_fallthru
      _
    // Predicated region
    $region14: #{tpu_custom_call.1} parent=1 // pred_check
      _
    $region15: #{tpu_custom_call.1} parent=1 // pred_check_branch
      %18 = sbr.rel (0) target = $region17
    $region16: #{tpu_custom_call.1} parent=1 // pred_region
      _
    $region17: #{tpu_custom_call.1} parent=1 // pred_fallthru
      _
    // Predicated region
    $region18: #{tpu_custom_call.1} parent=1 // pred_check
      _
    $region19: #{tpu_custom_call.1} parent=1 // pred_check_branch
      %20 = sbr.rel (0) target = $region21
    $region20: #{tpu_custom_call.1} parent=1 // pred_region
      _
    $region21: #{tpu_custom_call.1} parent=1 // pred_fallthru
      _
    %v21 = vld [vmem:[%s1] sm:$0xff]
    %v22 = vld [vmem:[%s1 + $0x8] sm:$0xff]
    %v23 = vld [vmem:[%s1 + $0x10] sm:$0xff]
    %v24 = vld [vmem:[%s1 + $0x18] sm:$0xff]
    %v25 = vld [vmem:[%s3] sm:$0xff]
    %v26 = vld [vmem:[%s3 + $0x8] sm:$0xff]
    %v27 = vld [vmem:[%s3 + $0x10] sm:$0xff]
    %v28 = vld [vmem:[%s3 + $0x18] sm:$0xff]
    %v29 = vld [vmem:[%s3 + $0x20] sm:$0xff]
    %v30 = vld [vmem:[%s3 + $0x28] sm:$0xff]
    %v31 = vld [vmem:[%s3 + $0x30] sm:$0xff]
    %v32 = vld [vmem:[%s3 + $0x38] sm:$0xff]
    %v33 = vld [vmem:[%s3 + $0x40] sm:$0xff]
    %v34 = vld [vmem:[%s3 + $0x48] sm:$0xff]
    %v35 = vld [vmem:[%s3 + $0x50] sm:$0xff]
    %v36 = vld [vmem:[%s3 + $0x58] sm:$0xff]
    %v37 = vld [vmem:[%s3 + $0x60] sm:$0xff]
    %v38 = vld [vmem:[%s3 + $0x68] sm:$0xff]
    %v39 = vld [vmem:[%s3 + $0x70] sm:$0xff]
    %v40 = vld [vmem:[%s3 + $0x78] sm:$0xff]
    %v41 = vld [vmem:[%s2] sm:$0x1]
    %v42 = vld [vmem:[%s4] sm:$0x1]
    %v43 = vld [vmem:[%s0] sm:$0x77]
    %v45 = vperm.slane %v41, 0
    %vm47 = vcmask 261120
    %v49 = vsel %vm47, %v43, 0
    %51 = vmatpush.msra.mxu0 0.0
    %52 = vmatpush.msra.mxu0 0.0
    %53 = vmatpush.msra.mxu0 0.0
    %54 = vmatpush.msra.mxu0 0.0
    %55 = vmatpush.msra.mxu0 0.0
    %56 = vmatpush.msra.mxu0 0.0
    %57 = vmatpush.msra.mxu0 0.0
    %58 = vmatpush.msra.mxu0 0.0
    %59 = vmatpush.msra.mxu0 0.0
    %60 = vmatpush.msra.mxu0 0.0
    %61 = vmatpush.msra.mxu0 0.0
    %62 = vmatpush.msra.mxu0 0.0
    %63 = vmatpush.msra.mxu0 %v24
    %64 = vmatpush.msra.mxu0 %v23
    %65 = vmatpush.msra.mxu0 %v22
    %66 = vmatpush.msra.mxu0 %v21
    %67 = vmatmul.f32.gmra.mxu0 %v49
    %v68 = vpop.f32.mrf.mxu0
    %v69 = vadd.f32 %v45, %v68
    %70 = vdwg.mxu0
    %v71 = vmax.f32 %v69, 0.0
    %72 = vmatpush.msra.mxu0 %v40
    %73 = vmatpush.msra.mxu0 %v39
    %74 = vmatpush.msra.mxu0 %v38
    %75 = vmatpush.msra.mxu0 %v37
    %76 = vmatpush.msra.mxu0 %v36
    %77 = vmatpush.msra.mxu0 %v35
    %78 = vmatpush.msra.mxu0 %v34
    %79 = vmatpush.msra.mxu0 %v33
    %80 = vmatpush.msra.mxu0 %v32
    %81 = vmatpush.msra.mxu0 %v31
    %82 = vmatpush.msra.mxu0 %v30
    %83 = vmatpush.msra.mxu0 %v29
    %84 = vmatpush.msra.mxu0 %v28
    %85 = vmatpush.msra.mxu0 %v27
    %86 = vmatpush.msra.mxu0 %v26
    %87 = vmatpush.msra.mxu0 %v25
    %88 = vmatmul.f32.gmra.mxu0 %v71
    %v89 = vpop.f32.mrf.mxu0
    %v90 = vadd.f32 0.0, %v89
    %91 = vdwg.mxu0
    %92 = vst [vmem:[#allocation1] ss:$2 sm:$0xff] %v43
    %v93 = vld.sshfl [vmem:[#allocation1] sm:$0xff pattern:$0x75316420]
    %94 = vrot.lane.b32.xlu0 %v93, 96
    %v95 = vpop.permute.xlu0 %94
    %v96 = vsel %vm47, %v95, 0
    %98 = vmatpush.msra.mxu0 0.0
    %99 = vmatpush.msra.mxu0 0.0
    %100 = vmatpush.msra.mxu0 0.0
    %101 = vmatpush.msra.mxu0 0.0
    %102 = vmatpush.msra.mxu0 0.0
    %103 = vmatpush.msra.mxu0 0.0
    %104 = vmatpush.msra.mxu0 0.0
    %105 = vmatpush.msra.mxu0 0.0
    %106 = vmatpush.msra.mxu0 0.0
    %107 = vmatpush.msra.mxu0 0.0
    %108 = vmatpush.msra.mxu0 0.0
    %109 = vmatpush.msra.mxu0 0.0
    %110 = vmatpush.msra.mxu0 %v24
    %111 = vmatpush.msra.mxu0 %v23
    %112 = vmatpush.msra.mxu0 %v22
    %113 = vmatpush.msra.mxu0 %v21
    %114 = vmatmul.f32.gmra.mxu0 %v96
    %v115 = vpop.f32.mrf.mxu0
    %v116 = vadd.f32 %v45, %v115
    %117 = vdwg.mxu0
    %v118 = vmax.f32 %v116, 0.0
    %119 = vmatpush.msra.mxu0 %v40
    %120 = vmatpush.msra.mxu0 %v39
    %121 = vmatpush.msra.mxu0 %v38
    %122 = vmatpush.msra.mxu0 %v37
    %123 = vmatpush.msra.mxu0 %v36
    %124 = vmatpush.msra.mxu0 %v35
    %125 = vmatpush.msra.mxu0 %v34
    %126 = vmatpush.msra.mxu0 %v33
    %127 = vmatpush.msra.mxu0 %v32
    %128 = vmatpush.msra.mxu0 %v31
    %129 = vmatpush.msra.mxu0 %v30
    %130 = vmatpush.msra.mxu0 %v29
    %131 = vmatpush.msra.mxu0 %v28
    %132 = vmatpush.msra.mxu0 %v27
    %133 = vmatpush.msra.mxu0 %v26
    %134 = vmatpush.msra.mxu0 %v25
    %135 = vmatmul.f32.gmra.mxu0 %v118
    %v136 = vpop.f32.mrf.mxu0
    %v137 = vadd.f32 0.0, %v136
    %138 = vdwg.mxu0
    %139 = vst [vmem:[#allocation1] ss:$2 sm:$0xff] %v43
    %v140 = vld.sshfl [vmem:[#allocation1] sm:$0xff pattern:$0x75316420]
    %141 = vrot.lane.b32.xlu0 %v140, 64
    %v142 = vpop.permute.xlu0 %141
    %v143 = vsel %vm47, %v142, 0
    %145 = vmatpush.msra.mxu0 0.0
    %146 = vmatpush.msra.mxu0 0.0
    %147 = vmatpush.msra.mxu0 0.0
    %148 = vmatpush.msra.mxu0 0.0
    %149 = vmatpush.msra.mxu0 0.0
    %150 = vmatpush.msra.mxu0 0.0
    %151 = vmatpush.msra.mxu0 0.0
    %152 = vmatpush.msra.mxu0 0.0
    %153 = vmatpush.msra.mxu0 0.0
    %154 = vmatpush.msra.mxu0 0.0
    %155 = vmatpush.msra.mxu0 0.0
    %156 = vmatpush.msra.mxu0 0.0
    %157 = vmatpush.msra.mxu0 %v24
    %158 = vmatpush.msra.mxu0 %v23
    %159 = vmatpush.msra.mxu0 %v22
    %160 = vmatpush.msra.mxu0 %v21
    %161 = vmatmul.f32.gmra.mxu0 %v143
    %v162 = vpop.f32.mrf.mxu0
    %v163 = vadd.f32 %v45, %v162
    %164 = vdwg.mxu0
    %v165 = vmax.f32 %v163, 0.0
    %166 = vmatpush.msra.mxu0 %v40
    %167 = vmatpush.msra.mxu0 %v39
    %168 = vmatpush.msra.mxu0 %v38
    %169 = vmatpush.msra.mxu0 %v37
    %170 = vmatpush.msra.mxu0 %v36
    %171 = vmatpush.msra.mxu0 %v35
    %172 = vmatpush.msra.mxu0 %v34
    %173 = vmatpush.msra.mxu0 %v33
    %174 = vmatpush.msra.mxu0 %v32
    %175 = vmatpush.msra.mxu0 %v31
    %176 = vmatpush.msra.mxu0 %v30
    %177 = vmatpush.msra.mxu0 %v29
    %178 = vmatpush.msra.mxu0 %v28
    %179 = vmatpush.msra.mxu0 %v27
    %180 = vmatpush.msra.mxu0 %v26
    %181 = vmatpush.msra.mxu0 %v25
    %182 = vmatmul.f32.gmra.mxu0 %v165
    %v183 = vpop.f32.mrf.mxu0
    %v184 = vadd.f32 0.0, %v183
    %185 = vdwg.mxu0
    %186 = vst [vmem:[#allocation1] ss:$2 sm:$0xff] %v43
    %v187 = vld.sshfl [vmem:[#allocation1] sm:$0xff pattern:$0x75316420]
    %188 = vrot.lane.b32.xlu0 %v187, 32
    %v189 = vpop.permute.xlu0 %188
    %v190 = vsel %vm47, %v189, 0
    %192 = vmatpush.msra.mxu0 0.0
    %193 = vmatpush.msra.mxu0 0.0
    %194 = vmatpush.msra.mxu0 0.0
    %195 = vmatpush.msra.mxu0 0.0
    %196 = vmatpush.msra.mxu0 0.0
    %197 = vmatpush.msra.mxu0 0.0
    %198 = vmatpush.msra.mxu0 0.0
    %199 = vmatpush.msra.mxu0 0.0
    %200 = vmatpush.msra.mxu0 0.0
    %201 = vmatpush.msra.mxu0 0.0
    %202 = vmatpush.msra.mxu0 0.0
    %203 = vmatpush.msra.mxu0 0.0
    %204 = vmatpush.msra.mxu0 %v24
    %205 = vmatpush.msra.mxu0 %v23
    %206 = vmatpush.msra.mxu0 %v22
    %207 = vmatpush.msra.mxu0 %v21
    %208 = vmatmul.f32.gmra.mxu0 %v190
    %v209 = vpop.f32.mrf.mxu0
    %v210 = vadd.f32 %v45, %v209
    %211 = vdwg.mxu0
    %v212 = vmax.f32 %v210, 0.0
    %213 = vmatpush.msra.mxu0 %v40
    %214 = vmatpush.msra.mxu0 %v39
    %215 = vmatpush.msra.mxu0 %v38
    %216 = vmatpush.msra.mxu0 %v37
    %217 = vmatpush.msra.mxu0 %v36
    %218 = vmatpush.msra.mxu0 %v35
    %219 = vmatpush.msra.mxu0 %v34
    %220 = vmatpush.msra.mxu0 %v33
    %221 = vmatpush.msra.mxu0 %v32
    %222 = vmatpush.msra.mxu0 %v31
    %223 = vmatpush.msra.mxu0 %v30
    %224 = vmatpush.msra.mxu0 %v29
    %225 = vmatpush.msra.mxu0 %v28
    %226 = vmatpush.msra.mxu0 %v27
    %227 = vmatpush.msra.mxu0 %v26
    %228 = vmatpush.msra.mxu0 %v25
    %229 = vmatmul.f32.gmra.mxu0 %v212
    %v230 = vpop.f32.mrf.mxu0
    %v231 = vadd.f32 0.0, %v230
    %232 = vdwg.mxu0
    %233 = vst [vmem:[#allocation1] ss:$2 sm:$0xff] %v43
    %v234 = vld.sshfl [vmem:[#allocation1 + $0x8] sm:$0xff pattern:$0x75316420]
    %v235 = vsel %vm47, %v234, 0
    %237 = vmatpush.msra.mxu0 0.0
    %238 = vmatpush.msra.mxu0 0.0
    %239 = vmatpush.msra.mxu0 0.0
    %240 = vmatpush.msra.mxu0 0.0
    %241 = vmatpush.msra.mxu0 0.0
    %242 = vmatpush.msra.mxu0 0.0
    %243 = vmatpush.msra.mxu0 0.0
    %244 = vmatpush.msra.mxu0 0.0
    %245 = vmatpush.msra.mxu0 0.0
    %246 = vmatpush.msra.mxu0 0.0
    %247 = vmatpush.msra.mxu0 0.0
    %248 = vmatpush.msra.mxu0 0.0
    %249 = vmatpush.msra.mxu0 %v24
    %250 = vmatpush.msra.mxu0 %v23
    %251 = vmatpush.msra.mxu0 %v22
    %252 = vmatpush.msra.mxu0 %v21
    %253 = vmatmul.f32.gmra.mxu0 %v235
    %v254 = vpop.f32.mrf.mxu0
    %v255 = vadd.f32 %v45, %v254
    %256 = vdwg.mxu0
    %v257 = vmax.f32 %v255, 0.0
    %258 = vmatpush.msra.mxu0 %v40
    %259 = vmatpush.msra.mxu0 %v39
    %260 = vmatpush.msra.mxu0 %v38
    %261 = vmatpush.msra.mxu0 %v37
    %262 = vmatpush.msra.mxu0 %v36
    %263 = vmatpush.msra.mxu0 %v35
    %264 = vmatpush.msra.mxu0 %v34
    %265 = vmatpush.msra.mxu0 %v33
    %266 = vmatpush.msra.mxu0 %v32
    %267 = vmatpush.msra.mxu0 %v31
    %268 = vmatpush.msra.mxu0 %v30
    %269 = vmatpush.msra.mxu0 %v29
    %270 = vmatpush.msra.mxu0 %v28
    %271 = vmatpush.msra.mxu0 %v27
    %272 = vmatpush.msra.mxu0 %v26
    %273 = vmatpush.msra.mxu0 %v25
    %274 = vmatmul.f32.gmra.mxu0 %v257
    %v275 = vpop.f32.mrf.mxu0
    %v276 = vadd.f32 0.0, %v275
    %277 = vdwg.mxu0
    %278 = vst [vmem:[#allocation1] ss:$2 sm:$0xff] %v43
    %v279 = vld.sshfl [vmem:[#allocation1 + $0x8] sm:$0xff pattern:$0x75316420]
    %280 = vrot.lane.b32.xlu0 %v279, 96
    %v281 = vpop.permute.xlu0 %280
    %v282 = vsel %vm47, %v281, 0
    %284 = vmatpush.msra.mxu0 0.0
    %285 = vmatpush.msra.mxu0 0.0
    %286 = vmatpush.msra.mxu0 0.0
    %287 = vmatpush.msra.mxu0 0.0
    %288 = vmatpush.msra.mxu0 0.0
    %289 = vmatpush.msra.mxu0 0.0
    %290 = vmatpush.msra.mxu0 0.0
    %291 = vmatpush.msra.mxu0 0.0
    %292 = vmatpush.msra.mxu0 0.0
    %293 = vmatpush.msra.mxu0 0.0
    %294 = vmatpush.msra.mxu0 0.0
    %295 = vmatpush.msra.mxu0 0.0
    %296 = vmatpush.msra.mxu0 %v24
    %297 = vmatpush.msra.mxu0 %v23
    %298 = vmatpush.msra.mxu0 %v22
    %299 = vmatpush.msra.mxu0 %v21
    %300 = vmatmul.f32.gmra.mxu0 %v282
    %v301 = vpop.f32.mrf.mxu0
    %v302 = vadd.f32 %v45, %v301
    %303 = vdwg.mxu0
    %v304 = vmax.f32 %v302, 0.0
    %305 = vmatpush.msra.mxu0 %v40
    %306 = vmatpush.msra.mxu0 %v39
    %307 = vmatpush.msra.mxu0 %v38
    %308 = vmatpush.msra.mxu0 %v37
    %309 = vmatpush.msra.mxu0 %v36
    %310 = vmatpush.msra.mxu0 %v35
    %311 = vmatpush.msra.mxu0 %v34
    %312 = vmatpush.msra.mxu0 %v33
    %313 = vmatpush.msra.mxu0 %v32
    %314 = vmatpush.msra.mxu0 %v31
    %315 = vmatpush.msra.mxu0 %v30
    %316 = vmatpush.msra.mxu0 %v29
    %317 = vmatpush.msra.mxu0 %v28
    %318 = vmatpush.msra.mxu0 %v27
    %319 = vmatpush.msra.mxu0 %v26
    %320 = vmatpush.msra.mxu0 %v25
    %321 = vmatmul.f32.gmra.mxu0 %v304
    %v322 = vpop.f32.mrf.mxu0
    %v323 = vadd.f32 0.0, %v322
    %324 = vdwg.mxu0
    %325 = vst [vmem:[#allocation1] ss:$2 sm:$0xff] %v43
    %v326 = vld.sshfl [vmem:[#allocation1 + $0x8] sm:$0xff pattern:$0x75316420]
    %327 = vrot.lane.b32.xlu0 %v326, 64
    %v328 = vpop.permute.xlu0 %327
    %v329 = vsel %vm47, %v328, 0
    %331 = vmatpush.msra.mxu0 0.0
    %332 = vmatpush.msra.mxu0 0.0
    %333 = vmatpush.msra.mxu0 0.0
    %334 = vmatpush.msra.mxu0 0.0
    %335 = vmatpush.msra.mxu0 0.0
    %336 = vmatpush.msra.mxu0 0.0
    %337 = vmatpush.msra.mxu0 0.0
    %338 = vmatpush.msra.mxu0 0.0
    %339 = vmatpush.msra.mxu0 0.0
    %340 = vmatpush.msra.mxu0 0.0
    %341 = vmatpush.msra.mxu0 0.0
    %342 = vmatpush.msra.mxu0 0.0
    %343 = vmatpush.msra.mxu0 %v24
    %344 = vmatpush.msra.mxu0 %v23
    %345 = vmatpush.msra.mxu0 %v22
    %346 = vmatpush.msra.mxu0 %v21
    %347 = vmatmul.f32.gmra.mxu0 %v329
    %v348 = vpop.f32.mrf.mxu0
    %v349 = vadd.f32 %v45, %v348
    %350 = vdwg.mxu0
    %v351 = vmax.f32 %v349, 0.0
    %352 = vmatpush.msra.mxu0 %v40
    %353 = vmatpush.msra.mxu0 %v39
    %354 = vmatpush.msra.mxu0 %v38
    %355 = vmatpush.msra.mxu0 %v37
    %356 = vmatpush.msra.mxu0 %v36
    %357 = vmatpush.msra.mxu0 %v35
    %358 = vmatpush.msra.mxu0 %v34
    %359 = vmatpush.msra.mxu0 %v33
    %360 = vmatpush.msra.mxu0 %v32
    %361 = vmatpush.msra.mxu0 %v31
    %362 = vmatpush.msra.mxu0 %v30
    %363 = vmatpush.msra.mxu0 %v29
    %364 = vmatpush.msra.mxu0 %v28
    %365 = vmatpush.msra.mxu0 %v27
    %366 = vmatpush.msra.mxu0 %v26
    %367 = vmatpush.msra.mxu0 %v25
    %368 = vmatmul.f32.gmra.mxu0 %v351
    %v369 = vpop.f32.mrf.mxu0
    %v370 = vadd.f32 0.0, %v369
    %371 = vdwg.mxu0
    %372 = vst [vmem:[#allocation1] ss:$2 sm:$0xff] %v43
    %v373 = vld.sshfl [vmem:[#allocation1 + $0x8] sm:$0xff pattern:$0x75316420]
    %374 = vrot.lane.b32.xlu0 %v373, 32
    %v375 = vpop.permute.xlu0 %374
    %v376 = vsel %vm47, %v375, 0
    %378 = vmatpush.msra.mxu0 0.0
    %379 = vmatpush.msra.mxu0 0.0
    %380 = vmatpush.msra.mxu0 0.0
    %381 = vmatpush.msra.mxu0 0.0
    %382 = vmatpush.msra.mxu0 0.0
    %383 = vmatpush.msra.mxu0 0.0
    %384 = vmatpush.msra.mxu0 0.0
    %385 = vmatpush.msra.mxu0 0.0
    %386 = vmatpush.msra.mxu0 0.0
    %387 = vmatpush.msra.mxu0 0.0
    %388 = vmatpush.msra.mxu0 0.0
    %389 = vmatpush.msra.mxu0 0.0
    %390 = vmatpush.msra.mxu0 %v24
    %391 = vmatpush.msra.mxu0 %v23
    %392 = vmatpush.msra.mxu0 %v22
    %393 = vmatpush.msra.mxu0 %v21
    %394 = vmatmul.f32.gmra.mxu0 %v376
    %v395 = vpop.f32.mrf.mxu0
    %v396 = vadd.f32 %v45, %v395
    %397 = vdwg.mxu0
    %v398 = vmax.f32 %v396, 0.0
    %399 = vmatpush.msra.mxu0 %v40
    %400 = vmatpush.msra.mxu0 %v39
    %401 = vmatpush.msra.mxu0 %v38
    %402 = vmatpush.msra.mxu0 %v37
    %403 = vmatpush.msra.mxu0 %v36
    %404 = vmatpush.msra.mxu0 %v35
    %405 = vmatpush.msra.mxu0 %v34
    %406 = vmatpush.msra.mxu0 %v33
    %407 = vmatpush.msra.mxu0 %v32
    %408 = vmatpush.msra.mxu0 %v31
    %409 = vmatpush.msra.mxu0 %v30
    %410 = vmatpush.msra.mxu0 %v29
    %411 = vmatpush.msra.mxu0 %v28
    %412 = vmatpush.msra.mxu0 %v27
    %413 = vmatpush.msra.mxu0 %v26
    %414 = vmatpush.msra.mxu0 %v25
    %415 = vmatmul.f32.gmra.mxu0 %v398
    %v416 = vpop.f32.mrf.mxu0
    %v417 = vadd.f32 0.0, %v416
    %418 = vdwg.mxu0
    %420 = vrot.lane.b32.xlu0 %v137, 16
    %v421 = vpop.permute.xlu0 %420
    %424 = vrot.lane.b32.xlu0 %v184, 32
    %v425 = vpop.permute.xlu0 %424
    %428 = vrot.lane.b32.xlu0 %v231, 48
    %v429 = vpop.permute.xlu0 %428
    %432 = vrot.lane.b32.xlu0 %v276, 64
    %v433 = vpop.permute.xlu0 %432
    %436 = vrot.lane.b32.xlu0 %v323, 80
    %v437 = vpop.permute.xlu0 %436
    %440 = vrot.lane.b32.xlu0 %v370, 96
    %v441 = vpop.permute.xlu0 %440
    %444 = vrot.lane.b32.xlu0 %v417, 112
    %v445 = vpop.permute.xlu0 %444
    %vm447 = vcmask 130048
    %v448 = vsel %vm447, %v90, %v421
    %v449 = vsel %vm47, %v448, %v425
    %vm450 = vcmask 392192
    %v451 = vsel %vm450, %v449, %v429
    %vm452 = vcmask 523264
    %v453 = vsel %vm452, %v451, %v433
    %vm454 = vcmask 654336
    %v455 = vsel %vm454, %v453, %v437
    %vm456 = vcmask 785408
    %v457 = vsel %vm456, %v455, %v441
    %vm458 = vcmask 916480
    %v459 = vsel %vm458, %v457, %v445
    %v461 = vperm.slane %v42, 0
    %v463 = vadd.f32 %v459, %v461
    %464 = vst [vmem:[#allocation2] sm:$0x7] %v463
    // Predicated region
    $region22: #{tpu_custom_call.1} parent=1 // pred_check
      _
    $region23: #{tpu_custom_call.1} parent=1 // pred_check_branch
      %466 = sbr.rel (0) target = $region25
    $region24: #{tpu_custom_call.1} parent=1 // pred_region
      %468 = vsyncadd [#allocation3], 0
      %s470 = sshll.u32 [#allocation2], 4
      %s471 = int_to_ptr.vmem [resolvable:$true] %s470
      %s472 = sshll.u32 %s5, 4
      %s473 = int_to_ptr.hbm [resolvable:$true] %s472
      %475 = dma.vmem_to_hbm [thread:$0]  %s471, 64, %s473, [#allocation3]
    $region25: #{tpu_custom_call.1} parent=1 // pred_fallthru
      _
    // Predicated region
    $region26: #{tpu_custom_call.1} parent=1 // pred_check
      _
    $region27: #{tpu_custom_call.1} parent=1 // pred_check_branch
      %477 = sbr.rel (0) target = $region29
    $region28: #{tpu_custom_call.1} parent=1 // pred_region
      %479 = dma.done [#allocation3], 64
    $region29: #{tpu_custom_call.1} parent=1 // pred_fallthru
      _
    %480 = vsyncpa [#allocation3], 1

</llo_original>
